<compile_context>
chip_gen: v6e
topology: v6e:2x2x1
jax: 0.10.0
libtpu: 0.0.40
codegen_flags: <defaults>
</compile_context>

<pallas_src>
import functools

import jax
import jax.numpy as jnp
from jax.experimental import pallas as pl
from jax.experimental.pallas import tpu as pltpu

NEG_SLOPE = 0.01   # PyTorch LeakyReLU default
BN_EPS = 1e-5      # PyTorch BatchNorm1d default


def _leaky(x):
    return jnp.where(x >= 0, x, NEG_SLOPE * x)


def _round_up(n, m):
    return ((n + m - 1) // m) * m


def _music_classifier_kernel(ug_ref, ue_ref, tk_ref, te_ref, w_ref, b_ref,
                             out_ref, *, offs):
    """One batch tile of the forward pass.

    ug_ref: (tb, G)   user genre features            (f32)
    ue_ref: (tb, 1)   user extra feature             (f32)
    tk_ref: (tb, 16)  track key features             (f32)
    te_ref: (tb, 13)  track extra features           (f32)
    w_ref : (n_rows, 128) packed weights (compute dtype), VMEM-resident
    b_ref : (8, 128)  packed f32 biases (+ layer-1 user_extra row in row 5)
    out_ref: (tb, 2)  sigmoid outputs (f32)
    """
    o_ug, o_tk, o1e, o1t, o2, o3, o4 = offs
    f32 = jnp.float32
    wdt = w_ref.dtype
    G = ug_ref.shape[1]

    ug = ug_ref[...].astype(wdt)
    tk = tk_ref[...].astype(wdt)
    te = te_ref[...].astype(wdt)
    ue = ue_ref[...].astype(f32)

    # Stage 0: both embedding Linears fused into one 16-lane accumulator:
    #   lanes [0:10] = emb_user_genre, [10:13] = emb_track_key, [13:16] = 0.
    emb = (
        jnp.dot(ug, w_ref[o_ug:o_ug + G, 0:16], preferred_element_type=f32)
        + jnp.dot(tk, w_ref[o_tk:o_tk + 16, 0:16], preferred_element_type=f32)
        + b_ref[0:1, 0:16]
    )
    emb = _leaky(emb)                                   # (tb,16); pad lanes stay 0

    # Stage 1: Linear(27,128) split into [emb part] + [track_extra part] +
    # [user_extra K=1 part as a VPU broadcast multiply]; then LeakyReLU.
    h = (
        jnp.dot(emb.astype(wdt), w_ref[o1e:o1e + 16, :], preferred_element_type=f32)
        + jnp.dot(te, w_ref[o1t:o1t + 13, :], preferred_element_type=f32)
        + ue * b_ref[5:6, :]
        + b_ref[1:2, :]
    )
    h = _leaky(h)                                       # (tb,128)

    # Stage 2: eval-mode BatchNorm1d(128) folded into Linear(128,64);
    # Dropout(0.1) == identity; LeakyReLU.
    h = _leaky(
        jnp.dot(h.astype(wdt), w_ref[o2:o2 + 128, 0:64], preferred_element_type=f32)
        + b_ref[2:3, 0:64]
    )                                                   # (tb,64)

    # Stage 3: Linear(64,32) + ReLU
    h = jnp.maximum(
        jnp.dot(h.astype(wdt), w_ref[o3:o3 + 64, 0:32], preferred_element_type=f32)
        + b_ref[3:4, 0:32],
        0.0,
    )                                                   # (tb,32)

    # Stage 4: Linear(32,2) + Sigmoid; narrow store (block last dim == full dim 2)
    logits = (
        jnp.dot(h.astype(wdt), w_ref[o4:o4 + 32, 0:2], preferred_element_type=f32)
        + b_ref[4:5, 0:2]
    )
    out_ref[...] = jax.nn.sigmoid(logits).astype(out_ref.dtype)


def _pack_params(params, G, compute_dtype):
    """Trace-time parameter fusion: BN fold + pack into one weight blob + one bias blob."""
    f32 = jnp.float32

    # Fold eval-mode BatchNorm into Linear(128,64)
    scale = params["gamma"] * jax.lax.rsqrt(params["var"] + BN_EPS)   # (1,128)
    shift = params["beta"] - params["mean"] * scale                   # (1,128)
    w2f = params["w2"] * scale.reshape(-1, 1)                         # (128,64)
    b2f = params["b2"] + shift @ params["w2"]                         # (1,64)

    w1 = params["w1"]   # (27,128) rows: [emb_u 10 | u_extra 1 | emb_t 3 | t_extra 13]
    g16 = _round_up(G, 16)

    segs, r = [], 0

    def add(seg_rows):
        nonlocal r
        off = r
        segs.append(seg_rows)
        r += seg_rows.shape[0]
        return off

    # 16-row-aligned segments so every in-kernel row slice starts on a packing boundary.
    o_ug = add(jnp.zeros((g16, 128), f32).at[0:G, 0:10].set(params["w_ug"]))
    o_tk = add(jnp.zeros((16, 128), f32).at[0:16, 10:13].set(params["w_tk"]))
    o1e = add(jnp.zeros((16, 128), f32)
              .at[0:10, :].set(w1[0:10])
              .at[10:13, :].set(w1[11:14]))
    o1t = add(jnp.zeros((16, 128), f32).at[0:13, :].set(w1[14:27]))
    o2 = add(jnp.zeros((128, 128), f32).at[:, 0:64].set(w2f))
    o3 = add(jnp.zeros((64, 128), f32).at[:, 0:32].set(params["w3"]))
    o4 = add(jnp.zeros((32, 128), f32).at[:, 0:2].set(params["w4"]))

    w_blob = jnp.concatenate(segs, axis=0).astype(compute_dtype)   # (n_rows,128)

    b_blob = jnp.zeros((8, 128), f32)
    b_blob = b_blob.at[0, 0:10].set(params["b_ug"][0])
    b_blob = b_blob.at[0, 10:13].set(params["b_tk"][0])
    b_blob = b_blob.at[1, :].set(params["b1"][0])
    b_blob = b_blob.at[2, 0:64].set(b2f[0])
    b_blob = b_blob.at[3, 0:32].set(params["b3"][0])
    b_blob = b_blob.at[4, 0:2].set(params["b4"][0])
    b_blob = b_blob.at[5, :].set(w1[10])   # layer-1 user_extra row (kept f32, VPU term)

    return w_blob, b_blob, (o_ug, o_tk, o1e, o1t, o2, o3, o4), r


def music_classifier_forward(user, track, params, *, block_batch=1024,
                             compute_dtype=jnp.bfloat16):
    """user = (user_genre (B,G), user_extra (B,1));
    track = (track_key (B,16), track_extra (B,13)). Returns (B,2) f32 probabilities."""
    user_genre, user_extra = user
    track_key, track_extra = track
    B, G = user_genre.shape

    w_blob, b_blob, offs, n_rows = _pack_params(params, G, compute_dtype)

    # Batch tile: multiple of 16 (sub-32-bit sublane packing); keep >=2 grid
    # steps when the batch allows so the "parallel" axis shards across v7x's 2 TCs.
    tb = min(_round_up(block_batch, 16), _round_up(B, 16))
    if B > 16 and _round_up(B, tb) // tb < 2:
        tb = _round_up(-(-B // 2), 16)
    b_pad = _round_up(B, tb)

    def _pad_rows(a):
        return a if b_pad == B else jnp.pad(a, ((0, b_pad - B), (0, 0)))

    ug = _pad_rows(user_genre)
    ue = _pad_rows(user_extra)
    tk = _pad_rows(track_key)
    te = _pad_rows(track_extra)

    grid = (b_pad // tb,)
    kernel = functools.partial(_music_classifier_kernel, offs=offs)

    flops = 2 * b_pad * (G * 16 + 16 * 16 + 16 * 128 + 13 * 128 + 128
                         + 128 * 64 + 64 * 32 + 32 * 2)
    bytes_accessed = (ug.nbytes + ue.nbytes + tk.nbytes + te.nbytes
                      + w_blob.nbytes + b_blob.nbytes + b_pad * 2 * 4)

    out = pl.pallas_call(
        kernel,
        out_shape=jax.ShapeDtypeStruct((b_pad, 2), jnp.float32),
        grid=grid,
        in_specs=[
            pl.BlockSpec((tb, G), lambda i: (i, 0)),        # user_genre  (batch-tiled)
            pl.BlockSpec((tb, 1), lambda i: (i, 0)),        # user_extra  (batch-tiled)
            pl.BlockSpec((tb, 16), lambda i: (i, 0)),       # track_key   (batch-tiled)
            pl.BlockSpec((tb, 13), lambda i: (i, 0)),       # track_extra (batch-tiled)
            pl.BlockSpec((n_rows, 128), lambda i: (0, 0)),  # packed weights: VMEM-resident
            pl.BlockSpec((8, 128), lambda i: (0, 0)),       # packed biases:  VMEM-resident
        ],
        out_specs=pl.BlockSpec((tb, 2), lambda i: (i, 0)),  # narrow f32 output
        compiler_params=pltpu.CompilerParams(dimension_semantics=("parallel",)),
        cost_estimate=pl.CostEstimate(
            flops=flops, transcendentals=b_pad * 2, bytes_accessed=bytes_accessed
        ),
    )(ug, ue, tk, te, w_blob, b_blob)

    return out if b_pad == B else out[:B]


def music_classifier_reference(user, track, params):
    """Pure-JAX reference matching the PyTorch module in eval mode."""
    ug, uo = user
    tk, to = track
    emb_u = _leaky(ug @ params["w_ug"] + params["b_ug"])
    emb_t = _leaky(tk @ params["w_tk"] + params["b_tk"])
    c = jnp.concatenate([emb_u, uo, emb_t, to], axis=1)
    h = _leaky(c @ params["w1"] + params["b1"])
    s = params["gamma"] * jax.lax.rsqrt(params["var"] + BN_EPS)
    h = (h - params["mean"]) * s + params["beta"]
    h = _leaky(h @ params["w2"] + params["b2"])
    h = jnp.maximum(h @ params["w3"] + params["b3"], 0.0)
    return jax.nn.sigmoid(h @ params["w4"] + params["b4"])


def init_params(key, n_genres):
    """Deterministic synthetic parameters with the shapes implied by __init__."""
    def dense(key, fan_in, fan_out):
        kw, kb = jax.random.split(key)
        s = 1.0 / jnp.sqrt(jnp.float32(fan_in))
        w = jax.random.uniform(kw, (fan_in, fan_out), jnp.float32, -s, s)
        b = jax.random.uniform(kb, (1, fan_out), jnp.float32, -s, s)
        return w, b

    keys = jax.random.split(key, 7)
    w_ug, b_ug = dense(keys[0], n_genres, 10)   # emb_user_genre
    w_tk, b_tk = dense(keys[1], 16, 3)          # emb_track_key
    w1, b1 = dense(keys[2], 27, 128)
    w2, b2 = dense(keys[3], 128, 64)
    w3, b3 = dense(keys[4], 64, 32)
    w4, b4 = dense(keys[5], 32, 2)

    kbn = jax.random.split(keys[6], 4)
    return dict(
        w_ug=w_ug, b_ug=b_ug, w_tk=w_tk, b_tk=b_tk,
        w1=w1, b1=b1,
        gamma=jax.random.uniform(kbn[0], (1, 128), jnp.float32, 0.5, 1.5),
        beta=jax.random.normal(kbn[1], (1, 128), jnp.float32) * 0.1,
        mean=jax.random.normal(kbn[2], (1, 128), jnp.float32) * 0.1,
        var=jax.random.uniform(kbn[3], (1, 128), jnp.float32, 0.5, 1.5),
        w2=w2, b2=b2, w3=w3, b3=b3, w4=w4, b4=b4,
    )


if __name__ == "__main__":
    B = 64
    N_GENRES = 8

    key = jax.random.PRNGKey(0)
    k_params, k_ug, k_uo, k_tk, k_to = jax.random.split(key, 5)

    params = init_params(k_params, N_GENRES)

    user_genre = jax.random.normal(k_ug, (B, N_GENRES), jnp.float32)
    user_extra = jax.random.normal(k_uo, (B, 1), jnp.float32)
    track_key = jax.random.normal(k_tk, (B, 16), jnp.float32)
    track_extra = jax.random.normal(k_to, (B, 13), jnp.float32)

    user = (user_genre, user_extra)
    track = (track_key, track_extra)

    ref = music_classifier_reference(user, track, params)

    # Exact-arithmetic path (f32 weights on the MXU) — validates the fusion math.
    out_f32 = jax.block_until_ready(
        music_classifier_forward(user, track, params,
                                 block_batch=16, compute_dtype=jnp.float32))
    assert out_f32.shape == (B, 2) and out_f32.dtype == jnp.float32
    assert bool(jnp.allclose(out_f32, ref, atol=1e-4, rtol=1e-4)), "f32 mismatch vs reference"

    # Default fast path: bf16 weights / MXU operands, f32 accumulation + elementwise.
    out_bf16 = jax.block_until_ready(
        music_classifier_forward(user, track, params, block_batch=16))
    assert out_bf16.shape == (B, 2) and out_bf16.dtype == jnp.float32
    assert bool(jnp.allclose(out_bf16, ref, atol=2e-2, rtol=2e-2)), "bf16 mismatch vs reference"

    print("KERNEL_OK")
</pallas_src>

<mosaic_0001>
module attributes {stable_mosaic.version = 11 : i64} {
  func.func @_music_classifier_kernel(%arg0: i32, %arg1: memref<16x8xf32, #tpu.memory_space<vmem>>, %arg2: memref<16x1xf32, #tpu.memory_space<vmem>>, %arg3: memref<16x16xf32, #tpu.memory_space<vmem>>, %arg4: memref<16x13xf32, #tpu.memory_space<vmem>>, %arg5: memref<288x128xf32, #tpu.memory_space<vmem>>, %arg6: memref<8x128xf32, #tpu.memory_space<vmem>>, %arg7: memref<16x2xf32, #tpu.memory_space<vmem>>) attributes {dimension_semantics = [#tpu.dimension_semantics<parallel>], iteration_bounds = array<i64: 4>, scalar_prefetch = 0 : i64, scratch_operands = 0 : i64, tpu.core_type = #tpu.core_type<tc>, window_params = [{transform_indices = @transform_0, window_bounds = array<i64: 16, 8>}, {transform_indices = @transform_1, window_bounds = array<i64: 16, 1>}, {transform_indices = @transform_2, window_bounds = array<i64: 16, 16>}, {transform_indices = @transform_3, window_bounds = array<i64: 16, 13>}, {pipeline_mode = #tpu.pipeline_mode<synchronous>, transform_indices = @transform_4, window_bounds = array<i64: 288, 128>}, {pipeline_mode = #tpu.pipeline_mode<synchronous>, transform_indices = @transform_5, window_bounds = array<i64: 8, 128>}, {transform_indices = @transform_6, window_bounds = array<i64: 16, 2>}]} {
    %c0 = arith.constant 0 : index
    %c0_0 = arith.constant 0 : index
    %0 = vector.load %arg1[%c0, %c0_0] : memref<16x8xf32, #tpu.memory_space<vmem>>, vector<16x8xf32>
    %c0_1 = arith.constant 0 : index
    %c0_2 = arith.constant 0 : index
    %1 = vector.load %arg3[%c0_1, %c0_2] : memref<16x16xf32, #tpu.memory_space<vmem>>, vector<16x16xf32>
    %c0_3 = arith.constant 0 : index
    %c0_4 = arith.constant 0 : index
    %2 = vector.load %arg4[%c0_3, %c0_4] : memref<16x13xf32, #tpu.memory_space<vmem>>, vector<16x13xf32>
    %c0_5 = arith.constant 0 : index
    %c0_6 = arith.constant 0 : index
    %3 = vector.load %arg2[%c0_5, %c0_6] : memref<16x1xf32, #tpu.memory_space<vmem>>, vector<16x1xf32>
    %c0_7 = arith.constant 0 : index
    %c0_8 = arith.constant 0 : index
    %4 = vector.load %arg5[%c0_7, %c0_8] : memref<288x128xf32, #tpu.memory_space<vmem>>, vector<8x16xf32>
    %cst = arith.constant dense<0.000000e+00> : vector<16x16xf32>
    %5 = tpu.matmul %0, %4, %cst {dimension_numbers = #tpu.dot_dimension_numbers<[1], [0], [0], [1], [0, 0, 1, 1], [], []>} : vector<16x8xf32>, vector<8x16xf32>, vector<16x16xf32> -> vector<16x16xf32>
    %c16 = arith.constant 16 : index
    %c0_9 = arith.constant 0 : index
    %6 = vector.load %arg5[%c16, %c0_9] : memref<288x128xf32, #tpu.memory_space<vmem>>, vector<16x16xf32>
    %cst_10 = arith.constant dense<0.000000e+00> : vector<16x16xf32>
    %7 = tpu.matmul %1, %6, %cst_10 {dimension_numbers = #tpu.dot_dimension_numbers<[1], [0], [0], [1], [0, 0, 1, 1], [], []>} : vector<16x16xf32>, vector<16x16xf32>, vector<16x16xf32> -> vector<16x16xf32>
    %8 = arith.addf %5, %7 : vector<16x16xf32>
    %c0_11 = arith.constant 0 : index
    %c0_12 = arith.constant 0 : index
    %9 = vector.load %arg6[%c0_11, %c0_12] : memref<8x128xf32, #tpu.memory_space<vmem>>, vector<1x16xf32>
    %10 = vector.broadcast %9 : vector<1x16xf32> to vector<16x16xf32>
    %11 = arith.addf %8, %10 : vector<16x16xf32>
    %cst_13 = arith.constant 0.000000e+00 : f32
    %12 = vector.broadcast %cst_13 : f32 to vector<16x16xf32>
    %13 = arith.cmpf oge, %11, %12 : vector<16x16xf32>
    %cst_14 = arith.constant 0.00999999977 : f32
    %14 = vector.broadcast %cst_14 : f32 to vector<16x16xf32>
    %15 = arith.mulf %14, %11 : vector<16x16xf32>
    %16 = arith.select %13, %11, %15 : vector<16x16xi1>, vector<16x16xf32>
    %c32 = arith.constant 32 : index
    %c0_15 = arith.constant 0 : index
    %17 = vector.load %arg5[%c32, %c0_15] : memref<288x128xf32, #tpu.memory_space<vmem>>, vector<16x128xf32>
    %cst_16 = arith.constant dense<0.000000e+00> : vector<16x128xf32>
    %18 = tpu.matmul %16, %17, %cst_16 {dimension_numbers = #tpu.dot_dimension_numbers<[1], [0], [0], [1], [0, 0, 1, 1], [], []>} : vector<16x16xf32>, vector<16x128xf32>, vector<16x128xf32> -> vector<16x128xf32>
    %c48 = arith.constant 48 : index
    %c0_17 = arith.constant 0 : index
    %19 = vector.load %arg5[%c48, %c0_17] : memref<288x128xf32, #tpu.memory_space<vmem>>, vector<13x128xf32>
    %cst_18 = arith.constant dense<0.000000e+00> : vector<16x128xf32>
    %20 = tpu.matmul %2, %19, %cst_18 {dimension_numbers = #tpu.dot_dimension_numbers<[1], [0], [0], [1], [0, 0, 1, 1], [], []>} : vector<16x13xf32>, vector<13x128xf32>, vector<16x128xf32> -> vector<16x128xf32>
    %21 = arith.addf %18, %20 : vector<16x128xf32>
    %c5 = arith.constant 5 : index
    %c0_19 = arith.constant 0 : index
    %22 = vector.load %arg6[%c5, %c0_19] : memref<8x128xf32, #tpu.memory_space<vmem>>, vector<1x128xf32>
    %23 = vector.broadcast %3 : vector<16x1xf32> to vector<16x128xf32>
    %24 = vector.broadcast %22 : vector<1x128xf32> to vector<16x128xf32>
    %25 = arith.mulf %23, %24 : vector<16x128xf32>
    %26 = arith.addf %21, %25 : vector<16x128xf32>
    %c1 = arith.constant 1 : index
    %c0_20 = arith.constant 0 : index
    %27 = vector.load %arg6[%c1, %c0_20] : memref<8x128xf32, #tpu.memory_space<vmem>>, vector<1x128xf32>
    %28 = vector.broadcast %27 : vector<1x128xf32> to vector<16x128xf32>
    %29 = arith.addf %26, %28 : vector<16x128xf32>
    %cst_21 = arith.constant 0.000000e+00 : f32
    %30 = vector.broadcast %cst_21 : f32 to vector<16x128xf32>
    %31 = arith.cmpf oge, %29, %30 : vector<16x128xf32>
    %cst_22 = arith.constant 0.00999999977 : f32
    %32 = vector.broadcast %cst_22 : f32 to vector<16x128xf32>
    %33 = arith.mulf %32, %29 : vector<16x128xf32>
    %34 = arith.select %31, %29, %33 : vector<16x128xi1>, vector<16x128xf32>
    %c64 = arith.constant 64 : index
    %c0_23 = arith.constant 0 : index
    %35 = vector.load %arg5[%c64, %c0_23] : memref<288x128xf32, #tpu.memory_space<vmem>>, vector<128x64xf32>
    %cst_24 = arith.constant dense<0.000000e+00> : vector<16x64xf32>
    %36 = tpu.matmul %34, %35, %cst_24 {dimension_numbers = #tpu.dot_dimension_numbers<[1], [0], [0], [1], [0, 0, 1, 1], [], []>} : vector<16x128xf32>, vector<128x64xf32>, vector<16x64xf32> -> vector<16x64xf32>
    %c2 = arith.constant 2 : index
    %c0_25 = arith.constant 0 : index
    %37 = vector.load %arg6[%c2, %c0_25] : memref<8x128xf32, #tpu.memory_space<vmem>>, vector<1x64xf32>
    %38 = vector.broadcast %37 : vector<1x64xf32> to vector<16x64xf32>
    %39 = arith.addf %36, %38 : vector<16x64xf32>
    %cst_26 = arith.constant 0.000000e+00 : f32
    %40 = vector.broadcast %cst_26 : f32 to vector<16x64xf32>
    %41 = arith.cmpf oge, %39, %40 : vector<16x64xf32>
    %cst_27 = arith.constant 0.00999999977 : f32
    %42 = vector.broadcast %cst_27 : f32 to vector<16x64xf32>
    %43 = arith.mulf %42, %39 : vector<16x64xf32>
    %44 = arith.select %41, %39, %43 : vector<16x64xi1>, vector<16x64xf32>
    %c192 = arith.constant 192 : index
    %c0_28 = arith.constant 0 : index
    %45 = vector.load %arg5[%c192, %c0_28] : memref<288x128xf32, #tpu.memory_space<vmem>>, vector<64x32xf32>
    %cst_29 = arith.constant dense<0.000000e+00> : vector<16x32xf32>
    %46 = tpu.matmul %44, %45, %cst_29 {dimension_numbers = #tpu.dot_dimension_numbers<[1], [0], [0], [1], [0, 0, 1, 1], [], []>} : vector<16x64xf32>, vector<64x32xf32>, vector<16x32xf32> -> vector<16x32xf32>
    %c3 = arith.constant 3 : index
    %c0_30 = arith.constant 0 : index
    %47 = vector.load %arg6[%c3, %c0_30] : memref<8x128xf32, #tpu.memory_space<vmem>>, vector<1x32xf32>
    %48 = vector.broadcast %47 : vector<1x32xf32> to vector<16x32xf32>
    %49 = arith.addf %46, %48 : vector<16x32xf32>
    %cst_31 = arith.constant 0.000000e+00 : f32
    %50 = vector.broadcast %cst_31 : f32 to vector<16x32xf32>
    %51 = arith.maximumf %49, %50 : vector<16x32xf32>
    %c256 = arith.constant 256 : index
    %c0_32 = arith.constant 0 : index
    %52 = vector.load %arg5[%c256, %c0_32] : memref<288x128xf32, #tpu.memory_space<vmem>>, vector<32x2xf32>
    %cst_33 = arith.constant dense<0.000000e+00> : vector<16x2xf32>
    %53 = tpu.matmul %51, %52, %cst_33 {dimension_numbers = #tpu.dot_dimension_numbers<[1], [0], [0], [1], [0, 0, 1, 1], [], []>} : vector<16x32xf32>, vector<32x2xf32>, vector<16x2xf32> -> vector<16x2xf32>
    %c4 = arith.constant 4 : index
    %c0_34 = arith.constant 0 : index
    %54 = vector.load %arg6[%c4, %c0_34] : memref<8x128xf32, #tpu.memory_space<vmem>>, vector<1x2xf32>
    %55 = vector.broadcast %54 : vector<1x2xf32> to vector<16x2xf32>
    %56 = arith.addf %53, %55 : vector<16x2xf32>
    %57 = arith.negf %56 : vector<16x2xf32>
    %58 = math.exp %57 : vector<16x2xf32>
    %cst_35 = arith.constant 1.000000e+00 : f32
    %59 = vector.broadcast %cst_35 : f32 to vector<16x2xf32>
    %60 = arith.addf %59, %58 : vector<16x2xf32>
    %61 = arith.divf %59, %60 : vector<16x2xf32>
    %c0_36 = arith.constant 0 : index
    %c0_37 = arith.constant 0 : index
    %62 = vector.load %arg7[%c0_36, %c0_37] : memref<16x2xf32, #tpu.memory_space<vmem>>, vector<16x2xf32>
    tpu.vector_store %arg7[%c0_36, %c0_37], %61 {strides = array<i32>} : memref<16x2xf32, #tpu.memory_space<vmem>>, vector<16x2xf32>,
    return
  }
  func.func @transform_0(%arg0: i32) -> (i32, i32) {
    %c0_i32 = arith.constant 0 : i32
    %c0_i32_0 = arith.constant 0 : i32
    return %arg0, %c0_i32 : i32, i32
  }
  func.func @transform_1(%arg0: i32) -> (i32, i32) {
    %c0_i32 = arith.constant 0 : i32
    %c0_i32_0 = arith.constant 0 : i32
    return %arg0, %c0_i32 : i32, i32
  }
  func.func @transform_2(%arg0: i32) -> (i32, i32) {
    %c0_i32 = arith.constant 0 : i32
    %c0_i32_0 = arith.constant 0 : i32
    return %arg0, %c0_i32 : i32, i32
  }
  func.func @transform_3(%arg0: i32) -> (i32, i32) {
    %c0_i32 = arith.constant 0 : i32
    %c0_i32_0 = arith.constant 0 : i32
    return %arg0, %c0_i32 : i32, i32
  }
  func.func @transform_4(%arg0: i32) -> (i32, i32) {
    %c0_i32 = arith.constant 0 : i32
    %c0_i32_0 = arith.constant 0 : i32
    %c0_i32_1 = arith.constant 0 : i32
    return %c0_i32, %c0_i32_0 : i32, i32
  }
  func.func @transform_5(%arg0: i32) -> (i32, i32) {
    %c0_i32 = arith.constant 0 : i32
    %c0_i32_0 = arith.constant 0 : i32
    %c0_i32_1 = arith.constant 0 : i32
    return %c0_i32, %c0_i32_0 : i32, i32
  }
  func.func @transform_6(%arg0: i32) -> (i32, i32) {
    %c0_i32 = arith.constant 0 : i32
    %c0_i32_0 = arith.constant 0 : i32
    return %arg0, %c0_i32 : i32, i32
  }
}

</mosaic_0001>

<llo_original>
// kernel: tpu_custom_call.1
$region0: #{tpu_custom_call.1}
  #allocation0 [shape = 'u32[]', space=smem, size = 0x4, offset = 0x4, fixed_abs, tag = 'smem constant byte address 0x4 - core index']
  #allocation1 [shape = 'u32[144,128]{1,0:T(1,128)}', space=vmem, size = 0x12000, scoped, tag = 'internal scratch']
  %s0 = inlined_call_operand.vmem [shape: f32[64,8], index: 0, kind: input, shape index: {}]
  %s1 = inlined_call_operand.vmem [shape: f32[64,1], index: 1, kind: input, shape index: {}]
  %s2 = inlined_call_operand.vmem [shape: f32[64,16], index: 2, kind: input, shape index: {}]
  %s3 = inlined_call_operand.vmem [shape: f32[64,13], index: 3, kind: input, shape index: {}]
  %s4 = inlined_call_operand.vmem [shape: f32[288,128], index: 4, kind: input, shape index: {}]
  %s5 = inlined_call_operand.vmem [shape: f32[8,128], index: 5, kind: input, shape index: {}]
  %s6 = inlined_call_operand.vmem [shape: f32[64,2], index: 6, kind: output, shape index: {}]
  %s7 = sld [smem:[#allocation0]]
  $region57: #{tpu_custom_call.1} parent=0
    _
  %s9 = ssub.s32 1, %s7
  %s10 = scalar_select 0, %s9, %s7
  loop: start=0, step=1, limit=6
  $region2: #{tpu_custom_call.1} parent=0 // loop_pre_header
    _
  $region3: #{tpu_custom_call.1} parent=0 // loop_header
    %s12 = sphi 0, %s16
    %p13 = scmp.ge.s32.totalorder %s12, 6
    %s22 = sphi 0, %s24
    %s25 = sphi 0, %s22
    %s26 = sphi 0, %s25
    %s42 = sphi 0, %s26
    %s48 = sphi 0, %s50
    %s51 = sphi 0, %s48
    %s52 = sphi 0, %s51
    %s68 = sphi 0, %s52
    %s74 = sphi 0, %s76
    %s77 = sphi 0, %s74
    %s78 = sphi 0, %s77
    %s94 = sphi 0, %s78
    %s100 = sphi 0, %s102
    %s103 = sphi 0, %s100
    %s104 = sphi 0, %s103
    %s120 = sphi 0, %s104
    %s124 = sphi 0, %s124
    %s126 = sphi 0, %s124
    %s127 = sphi 0, %s126
    %s141 = sphi 0, %s127
    %s145 = sphi 0, %s145
    %s147 = sphi 0, %s145
    %s148 = sphi 0, %s147
    %s162 = sphi 0, %s148
    %s168 = sphi 0, %s170
    %s171 = sphi 0, %s168
    %s172 = sphi 0, %s171
    %s188 = sphi 0, %s172
  $region4: #{tpu_custom_call.1} parent=0 // loop_header_branch
    %15 = sbr.rel (%p13) target = $region8
  $region5: #{tpu_custom_call.1} parent=0 // loop_body
    %s17 = ssub.s32 %s12, 1
    %s18 = ssub.s32 %s12, 2
    %s19 = sadd.s32 %s12, 1
    %s20 = ssub.s32 %s12, %s19
    %p21 = scmp.eq.s32.totalorder %s20, 0
    %s23 = sadd.s32 %s22, 1
    %s24 = scalar_select %p21, %s22, %s23
    %p27 = pneg %p21
    %p28 = scmp.eq.s32.totalorder %s12, 3
    %p29 = por %p27, %p28
    %p30 = scmp.ne.s32.totalorder %s22, %s25
    %p31 = scmp.eq.s32.totalorder %s12, 0
    %p32 = por %p30, %p31
    %p33 = scmp.ne.s32.totalorder %s22, %s25
    %p34 = scmp.eq.s32.totalorder %s17, 3
    %p35 = por %p33, %p34
    %p36 = scmp.ne.s32.totalorder %s25, %s26
    %p37 = scmp.eq.s32.totalorder %s17, 0
    %p38 = por %p36, %p37
    %p39 = scmp.ne.s32.totalorder %s25, %s26
    %p40 = scmp.eq.s32.totalorder %s18, 3
    %p41 = por %p39, %p40
    %p43 = scmp.ne.s32.totalorder %s26, %s42
    %p44 = scmp.eq.s32.totalorder %s18, 0
    %p45 = por %p43, %p44
    %s46 = ssub.s32 %s12, %s19
    %p47 = scmp.eq.s32.totalorder %s46, 0
    %s49 = sadd.s32 %s48, 1
    %s50 = scalar_select %p47, %s48, %s49
    %p53 = pneg %p47
    %p54 = scmp.eq.s32.totalorder %s12, 3
    %p55 = por %p53, %p54
    %p56 = scmp.ne.s32.totalorder %s48, %s51
    %p57 = scmp.eq.s32.totalorder %s12, 0
    %p58 = por %p56, %p57
    %p59 = scmp.ne.s32.totalorder %s48, %s51
    %p60 = scmp.eq.s32.totalorder %s17, 3
    %p61 = por %p59, %p60
    %p62 = scmp.ne.s32.totalorder %s51, %s52
    %p63 = scmp.eq.s32.totalorder %s17, 0
    %p64 = por %p62, %p63
    %p65 = scmp.ne.s32.totalorder %s51, %s52
    %p66 = scmp.eq.s32.totalorder %s18, 3
    %p67 = por %p65, %p66
    %p69 = scmp.ne.s32.totalorder %s52, %s68
    %p70 = scmp.eq.s32.totalorder %s18, 0
    %p71 = por %p69, %p70
    %s72 = ssub.s32 %s12, %s19
    %p73 = scmp.eq.s32.totalorder %s72, 0
    %s75 = sadd.s32 %s74, 1
    %s76 = scalar_select %p73, %s74, %s75
    %p79 = pneg %p73
    %p80 = scmp.eq.s32.totalorder %s12, 3
    %p81 = por %p79, %p80
    %p82 = scmp.ne.s32.totalorder %s74, %s77
    %p83 = scmp.eq.s32.totalorder %s12, 0
    %p84 = por %p82, %p83
    %p85 = scmp.ne.s32.totalorder %s74, %s77
    %p86 = scmp.eq.s32.totalorder %s17, 3
    %p87 = por %p85, %p86
    %p88 = scmp.ne.s32.totalorder %s77, %s78
    %p89 = scmp.eq.s32.totalorder %s17, 0
    %p90 = por %p88, %p89
    %p91 = scmp.ne.s32.totalorder %s77, %s78
    %p92 = scmp.eq.s32.totalorder %s18, 3
    %p93 = por %p91, %p92
    %p95 = scmp.ne.s32.totalorder %s78, %s94
    %p96 = scmp.eq.s32.totalorder %s18, 0
    %p97 = por %p95, %p96
    %s98 = ssub.s32 %s12, %s19
    %p99 = scmp.eq.s32.totalorder %s98, 0
    %s101 = sadd.s32 %s100, 1
    %s102 = scalar_select %p99, %s100, %s101
    %p105 = pneg %p99
    %p106 = scmp.eq.s32.totalorder %s12, 3
    %p107 = por %p105, %p106
    %p108 = scmp.ne.s32.totalorder %s100, %s103
    %p109 = scmp.eq.s32.totalorder %s12, 0
    %p110 = por %p108, %p109
    %p111 = scmp.ne.s32.totalorder %s100, %s103
    %p112 = scmp.eq.s32.totalorder %s17, 3
    %p113 = por %p111, %p112
    %p114 = scmp.ne.s32.totalorder %s103, %s104
    %p115 = scmp.eq.s32.totalorder %s17, 0
    %p116 = por %p114, %p115
    %p117 = scmp.ne.s32.totalorder %s103, %s104
    %p118 = scmp.eq.s32.totalorder %s18, 3
    %p119 = por %p117, %p118
    %p121 = scmp.ne.s32.totalorder %s104, %s120
    %p122 = scmp.eq.s32.totalorder %s18, 0
    %p123 = por %p121, %p122
    %s125 = sadd.s32 %s124, 1
    %p128 = scmp.eq.s32.totalorder %s12, 3
    %p129 = scmp.ne.s32.totalorder %s124, %s126
    %p130 = scmp.eq.s32.totalorder %s12, 0
    %p131 = por %p129, %p130
    %p132 = scmp.ne.s32.totalorder %s124, %s126
    %p133 = scmp.eq.s32.totalorder %s17, 3
    %p134 = por %p132, %p133
    %p135 = scmp.ne.s32.totalorder %s126, %s127
    %p136 = scmp.eq.s32.totalorder %s17, 0
    %p137 = por %p135, %p136
    %p138 = scmp.ne.s32.totalorder %s126, %s127
    %p139 = scmp.eq.s32.totalorder %s18, 3
    %p140 = por %p138, %p139
    %p142 = scmp.ne.s32.totalorder %s127, %s141
    %p143 = scmp.eq.s32.totalorder %s18, 0
    %p144 = por %p142, %p143
    %s146 = sadd.s32 %s145, 1
    %p149 = scmp.eq.s32.totalorder %s12, 3
    %p150 = scmp.ne.s32.totalorder %s145, %s147
    %p151 = scmp.eq.s32.totalorder %s12, 0
    %p152 = por %p150, %p151
    %p153 = scmp.ne.s32.totalorder %s145, %s147
    %p154 = scmp.eq.s32.totalorder %s17, 3
    %p155 = por %p153, %p154
    %p156 = scmp.ne.s32.totalorder %s147, %s148
    %p157 = scmp.eq.s32.totalorder %s17, 0
    %p158 = por %p156, %p157
    %p159 = scmp.ne.s32.totalorder %s147, %s148
    %p160 = scmp.eq.s32.totalorder %s18, 3
    %p161 = por %p159, %p160
    %p163 = scmp.ne.s32.totalorder %s148, %s162
    %p164 = scmp.eq.s32.totalorder %s18, 0
    %p165 = por %p163, %p164
    %s166 = ssub.s32 %s12, %s19
    %p167 = scmp.eq.s32.totalorder %s166, 0
    %s169 = sadd.s32 %s168, 1
    %s170 = scalar_select %p167, %s168, %s169
    %p173 = pneg %p167
    %p174 = scmp.eq.s32.totalorder %s12, 3
    %p175 = por %p173, %p174
    %p176 = scmp.ne.s32.totalorder %s168, %s171
    %p177 = scmp.eq.s32.totalorder %s12, 0
    %p178 = por %p176, %p177
    %p179 = scmp.ne.s32.totalorder %s168, %s171
    %p180 = scmp.eq.s32.totalorder %s17, 3
    %p181 = por %p179, %p180
    %p182 = scmp.ne.s32.totalorder %s171, %s172
    %p183 = scmp.eq.s32.totalorder %s17, 0
    %p184 = por %p182, %p183
    %p185 = scmp.ne.s32.totalorder %s171, %s172
    %p186 = scmp.eq.s32.totalorder %s18, 3
    %p187 = por %p185, %p186
    %p189 = scmp.ne.s32.totalorder %s172, %s188
    %p190 = scmp.eq.s32.totalorder %s18, 0
    %p191 = por %p189, %p190
    %p192 = scmp.le.s32.totalorder 1, %s12
    %p193 = scmp.lt.s32.totalorder %s12, 5
    %p194 = pnand %p192, %p193
    %p195 = pneg %p194
    // Predicated region
    $region9: #{tpu_custom_call.1} parent=5 // pred_check
      _
    $region10: #{tpu_custom_call.1} parent=5 // pred_check_branch
      %197 = sbr.rel (%p194) target = $region12
    $region11: #{tpu_custom_call.1} parent=5 // pred_region
      %s198 = ssub.s32 %s12, 1
      // Predicated region
      $region13: #{tpu_custom_call.1} parent=11 // pred_check
        %p199 = pneg %p137
      $region14: #{tpu_custom_call.1} parent=11 // pred_check_branch
        %201 = sbr.rel (%p199) target = $region16
      $region15: #{tpu_custom_call.1} parent=11 // pred_region
        _
      $region16: #{tpu_custom_call.1} parent=11 // pred_fallthru
        _
      // Predicated region
      $region17: #{tpu_custom_call.1} parent=11 // pred_check
        %p202 = pneg %p158
      $region18: #{tpu_custom_call.1} parent=11 // pred_check_branch
        %204 = sbr.rel (%p202) target = $region20
      $region19: #{tpu_custom_call.1} parent=11 // pred_region
        _
      $region20: #{tpu_custom_call.1} parent=11 // pred_fallthru
        _
    $region12: #{tpu_custom_call.1} parent=5 // pred_fallthru
      _
    %p205 = scmp.lt.s32.totalorder %s12, 4
    // Predicated region
    $region21: #{tpu_custom_call.1} parent=5 // pred_check
      %p206 = pneg %p205
    $region22: #{tpu_custom_call.1} parent=5 // pred_check_branch
      %208 = sbr.rel (%p206) target = $region24
    $region23: #{tpu_custom_call.1} parent=5 // pred_region
      // Predicated region
      $region25: #{tpu_custom_call.1} parent=23 // pred_check
        %p209 = pneg %p32
      $region26: #{tpu_custom_call.1} parent=23 // pred_check_branch
        %211 = sbr.rel (%p209) target = $region28
      $region27: #{tpu_custom_call.1} parent=23 // pred_region
        %s212 = smul.u32 2, %s12
        %p213 = scmp.lt.s32.totalorder %s212, 7
        %s214 = scalar_select %p213, %s212, 7
        %s215 = smul.addr %s214, 8
        %s216 = scalar_lea.vmem %s0, %s215
        %s217 = smul.u32 2, %s12
      $region28: #{tpu_custom_call.1} parent=23 // pred_fallthru
        _
      // Predicated region
      $region29: #{tpu_custom_call.1} parent=23 // pred_check
        %p218 = pneg %p58
      $region30: #{tpu_custom_call.1} parent=23 // pred_check_branch
        %220 = sbr.rel (%p218) target = $region32
      $region31: #{tpu_custom_call.1} parent=23 // pred_region
        %s221 = smul.u32 2, %s12
        %p222 = scmp.lt.s32.totalorder %s221, 7
        %s223 = scalar_select %p222, %s221, 7
        %s224 = smul.addr %s223, 8
        %s225 = scalar_lea.vmem %s1, %s224
        %s226 = smul.u32 2, %s12
      $region32: #{tpu_custom_call.1} parent=23 // pred_fallthru
        _
      // Predicated region
      $region33: #{tpu_custom_call.1} parent=23 // pred_check
        %p227 = pneg %p84
      $region34: #{tpu_custom_call.1} parent=23 // pred_check_branch
        %229 = sbr.rel (%p227) target = $region36
      $region35: #{tpu_custom_call.1} parent=23 // pred_region
        %s230 = smul.u32 2, %s12
        %p231 = scmp.lt.s32.totalorder %s230, 7
        %s232 = scalar_select %p231, %s230, 7
        %s233 = smul.addr %s232, 8
        %s234 = scalar_lea.vmem %s2, %s233
        %s235 = smul.u32 2, %s12
      $region36: #{tpu_custom_call.1} parent=23 // pred_fallthru
        _
      // Predicated region
      $region37: #{tpu_custom_call.1} parent=23 // pred_check
        %p236 = pneg %p110
      $region38: #{tpu_custom_call.1} parent=23 // pred_check_branch
        %238 = sbr.rel (%p236) target = $region40
      $region39: #{tpu_custom_call.1} parent=23 // pred_region
        %s239 = smul.u32 2, %s12
        %p240 = scmp.lt.s32.totalorder %s239, 7
        %s241 = scalar_select %p240, %s239, 7
        %s242 = smul.addr %s241, 8
        %s243 = scalar_lea.vmem %s3, %s242
        %s244 = smul.u32 2, %s12
      $region40: #{tpu_custom_call.1} parent=23 // pred_fallthru
        _
    $region24: #{tpu_custom_call.1} parent=5 // pred_fallthru
      _
    %p245 = scmp.le.s32.totalorder 1, %s12
    %p246 = scmp.lt.s32.totalorder %s12, 5
    %p247 = pnand %p245, %p246
    %p248 = pneg %p247
    // Predicated region
    $region41: #{tpu_custom_call.1} parent=5 // pred_check
      _
    $region42: #{tpu_custom_call.1} parent=5 // pred_check_branch
      %250 = sbr.rel (%p247) target = $region44
    $region43: #{tpu_custom_call.1} parent=5 // pred_region
      %s251 = ssub.s32 %s12, 1
      %s252 = smul.u32 2, %s17
      %p253 = scmp.lt.s32.totalorder %s252, 7
      %s254 = scalar_select %p253, %s252, 7
      %s255 = smul.addr %s254, 8
      %s256 = scalar_lea.vmem %s0, %s255
      %p257 = pneg %p38
      %p258 = pneg %p35
      %s259 = smul.u32 2, %s17
      %p260 = scmp.lt.s32.totalorder %s259, 7
      %s261 = scalar_select %p260, %s259, 7
      %s262 = smul.addr %s261, 8
      %s263 = scalar_lea.vmem %s1, %s262
      %p264 = pneg %p64
      %p265 = pneg %p61
      %s266 = smul.u32 2, %s17
      %p267 = scmp.lt.s32.totalorder %s266, 7
      %s268 = scalar_select %p267, %s266, 7
      %s269 = smul.addr %s268, 8
      %s270 = scalar_lea.vmem %s2, %s269
      %p271 = pneg %p90
      %p272 = pneg %p87
      %s273 = smul.u32 2, %s17
      %p274 = scmp.lt.s32.totalorder %s273, 7
      %s275 = scalar_select %p274, %s273, 7
      %s276 = smul.addr %s275, 8
      %s277 = scalar_lea.vmem %s3, %s276
      %p278 = pneg %p116
      %p279 = pneg %p113
      %p280 = pneg %p137
      %p281 = pneg %p134
      %p282 = pneg %p158
      %p283 = pneg %p155
      %p284 = pneg %p184
      %p285 = pneg %p181
      %s286 = smul.u32 2, %s17
      %p287 = scmp.lt.s32.totalorder %s286, 7
      %s288 = scalar_select %p287, %s286, 7
      %s289 = smul.addr %s288, 8
      %s290 = scalar_lea.vmem %s6, %s289
      %s291 = smul.u32 2, %s17
      %p292 = scmp.lt.s32.totalorder %s291, 7
      %s293 = scalar_select %p292, %s291, 7
      %s294 = smul.addr %s293, 8
      %s295 = scalar_lea.vmem %s0, %s294
      %s296 = smul.u32 2, %s17
      %s297 = smul.u32 2, %s17
      %p298 = scmp.lt.s32.totalorder %s297, 7
      %s299 = scalar_select %p298, %s297, 7
      %s300 = smul.addr %s299, 8
      %s301 = scalar_lea.vmem %s1, %s300
      %s302 = smul.u32 2, %s17
      %s303 = smul.u32 2, %s17
      %p304 = scmp.lt.s32.totalorder %s303, 7
      %s305 = scalar_select %p304, %s303, 7
      %s306 = smul.addr %s305, 8
      %s307 = scalar_lea.vmem %s2, %s306
      %s308 = smul.u32 2, %s17
      %s309 = smul.u32 2, %s17
      %p310 = scmp.lt.s32.totalorder %s309, 7
      %s311 = scalar_select %p310, %s309, 7
      %s312 = smul.addr %s311, 8
      %s313 = scalar_lea.vmem %s3, %s312
      %s314 = smul.u32 2, %s17
      %s315 = smul.u32 2, %s17
      %p316 = scmp.lt.s32.totalorder %s315, 7
      %s317 = scalar_select %p316, %s315, 7
      %s318 = smul.addr %s317, 8
      %s319 = scalar_lea.vmem %s6, %s318
      %s320 = smul.u32 2, %s17
      %v321 = vld [vmem:[%s295] sm:$0xff]
      %v322 = vld [vmem:[%s295 + $0x8] sm:$0xff]
      %v323 = vld [vmem:[%s307] sm:$0xff]
      %v324 = vld [vmem:[%s307 + $0x8] sm:$0xff]
      %v325 = vld [vmem:[%s313] sm:$0xff]
      %v326 = vld [vmem:[%s313 + $0x8] sm:$0xff]
      %v327 = vld [vmem:[%s301] sm:$0xff]
      %v328 = vld [vmem:[%s301 + $0x8] sm:$0xff]
      %v329 = vld [vmem:[%s4] sm:$0xff]
      %v330 = vld [vmem:[%s4 + $0x10] sm:$0xff]
      %v331 = vld [vmem:[%s4 + $0x18] sm:$0xff]
      %vm332 = vcmask 130048
      %v334 = vsel %vm332, %v323, 0
      %v337 = vsel %vm332, %v324, 0
      %339 = vmatprep.subr.mxu0 0.0
      %340 = vmatpush1.msra.mxu0 0.0
      %341 = vmatprep.subr.mxu0 0.0
      %342 = vmatpush1.msra.mxu0 0.0
      %343 = vmatprep.subr.mxu0 0.0
      %344 = vmatpush1.msra.mxu0 0.0
      %345 = vmatprep.subr.mxu0 0.0
      %346 = vmatpush1.msra.mxu0 0.0
      %347 = vmatprep.subr.mxu0 0.0
      %348 = vmatpush1.msra.mxu0 0.0
      %349 = vmatprep.subr.mxu0 0.0
      %350 = vmatpush1.msra.mxu0 0.0
      %351 = vmatprep.subr.mxu0 0.0
      %352 = vmatpush1.msra.mxu0 0.0
      %353 = vmatprep.subr.mxu0 0.0
      %354 = vmatpush1.msra.mxu0 0.0
      %355 = vmatprep.subr.mxu0 0.0
      %356 = vmatpush1.msra.mxu0 0.0
      %357 = vmatprep.subr.mxu0 0.0
      %358 = vmatpush1.msra.mxu0 0.0
      %359 = vmatprep.subr.mxu0 0.0
      %360 = vmatpush1.msra.mxu0 0.0
      %361 = vmatprep.subr.mxu0 0.0
      %362 = vmatpush1.msra.mxu0 0.0
      %363 = vmatprep.subr.mxu0 0.0
      %364 = vmatpush1.msra.mxu0 0.0
      %365 = vmatprep.subr.mxu0 0.0
      %366 = vmatpush1.msra.mxu0 0.0
      %367 = vmatprep.subr.mxu0 0.0
      %368 = vmatpush1.msra.mxu0 %v331
      %369 = vmatprep.subr.mxu0 0.0
      %370 = vmatpush1.msra.mxu0 %v330
      %371 = vmatprep.subr.mxu0 0.0
      %372 = vmatpush2.msra.mxu0 0.0
      %373 = vmatprep.subr.mxu0 0.0
      %374 = vmatpush2.msra.mxu0 0.0
      %375 = vmatprep.subr.mxu0 0.0
      %376 = vmatpush2.msra.mxu0 0.0
      %377 = vmatprep.subr.mxu0 0.0
      %378 = vmatpush2.msra.mxu0 0.0
      %379 = vmatprep.subr.mxu0 0.0
      %380 = vmatpush2.msra.mxu0 0.0
      %381 = vmatprep.subr.mxu0 0.0
      %382 = vmatpush2.msra.mxu0 0.0
      %383 = vmatprep.subr.mxu0 0.0
      %384 = vmatpush2.msra.mxu0 0.0
      %385 = vmatprep.subr.mxu0 0.0
      %386 = vmatpush2.msra.mxu0 0.0
      %387 = vmatprep.subr.mxu0 0.0
      %388 = vmatpush2.msra.mxu0 0.0
      %389 = vmatprep.subr.mxu0 0.0
      %390 = vmatpush2.msra.mxu0 0.0
      %391 = vmatprep.subr.mxu0 0.0
      %392 = vmatpush2.msra.mxu0 0.0
      %393 = vmatprep.subr.mxu0 0.0
      %394 = vmatpush2.msra.mxu0 0.0
      %395 = vmatprep.subr.mxu0 0.0
      %396 = vmatpush2.msra.mxu0 0.0
      %397 = vmatprep.subr.mxu0 0.0
      %398 = vmatpush2.msra.mxu0 0.0
      %399 = vmatprep.subr.mxu0 0.0
      %400 = vmatpush2.msra.mxu0 0.0
      %401 = vmatprep.subr.mxu0 0.0
      %402 = vmatpush2.msra.mxu0 0.0
      %403 = vmatprep.mubr.f32.mxu0 0.0
      %404 = vmatmul.mubr.f32.gmra.mxu0 %v334
      %v405 = vpop.f32.mrf.mxu0
      %v406 = vadd.f32 0.0, %v405
      %v407 = vpop.f32.mrf.mxu0
      %408 = vmatprep.mubr.f32.mxu0 0.0
      %409 = vmatmul.mubr.f32.gmra.mxu0 %v337
      %v410 = vpop.f32.mrf.mxu0
      %v411 = vadd.f32 0.0, %v410
      %v412 = vpop.f32.mrf.mxu0
      %413 = vdwg.mxu0
      %vm414 = vcmask 64512
      %v416 = vsel %vm414, %v321, 0
      %v419 = vsel %vm414, %v322, 0
      %421 = vmatprep.subr.mxu0 0.0
      %422 = vmatpush1.msra.mxu0 0.0
      %423 = vmatprep.subr.mxu0 0.0
      %424 = vmatpush1.msra.mxu0 0.0
      %425 = vmatprep.subr.mxu0 0.0
      %426 = vmatpush1.msra.mxu0 0.0
      %427 = vmatprep.subr.mxu0 0.0
      %428 = vmatpush1.msra.mxu0 0.0
      %429 = vmatprep.subr.mxu0 0.0
      %430 = vmatpush1.msra.mxu0 0.0
      %431 = vmatprep.subr.mxu0 0.0
      %432 = vmatpush1.msra.mxu0 0.0
      %433 = vmatprep.subr.mxu0 0.0
      %434 = vmatpush1.msra.mxu0 0.0
      %435 = vmatprep.subr.mxu0 0.0
      %436 = vmatpush1.msra.mxu0 0.0
      %437 = vmatprep.subr.mxu0 0.0
      %438 = vmatpush1.msra.mxu0 0.0
      %439 = vmatprep.subr.mxu0 0.0
      %440 = vmatpush1.msra.mxu0 0.0
      %441 = vmatprep.subr.mxu0 0.0
      %442 = vmatpush1.msra.mxu0 0.0
      %443 = vmatprep.subr.mxu0 0.0
      %444 = vmatpush1.msra.mxu0 0.0
      %445 = vmatprep.subr.mxu0 0.0
      %446 = vmatpush1.msra.mxu0 0.0
      %447 = vmatprep.subr.mxu0 0.0
      %448 = vmatpush1.msra.mxu0 0.0
      %449 = vmatprep.subr.mxu0 0.0
      %450 = vmatpush1.msra.mxu0 0.0
      %451 = vmatprep.subr.mxu0 0.0
      %452 = vmatpush1.msra.mxu0 %v329
      %453 = vmatprep.subr.mxu0 0.0
      %454 = vmatpush2.msra.mxu0 0.0
      %455 = vmatprep.subr.mxu0 0.0
      %456 = vmatpush2.msra.mxu0 0.0
      %457 = vmatprep.subr.mxu0 0.0
      %458 = vmatpush2.msra.mxu0 0.0
      %459 = vmatprep.subr.mxu0 0.0
      %460 = vmatpush2.msra.mxu0 0.0
      %461 = vmatprep.subr.mxu0 0.0
      %462 = vmatpush2.msra.mxu0 0.0
      %463 = vmatprep.subr.mxu0 0.0
      %464 = vmatpush2.msra.mxu0 0.0
      %465 = vmatprep.subr.mxu0 0.0
      %466 = vmatpush2.msra.mxu0 0.0
      %467 = vmatprep.subr.mxu0 0.0
      %468 = vmatpush2.msra.mxu0 0.0
      %469 = vmatprep.subr.mxu0 0.0
      %470 = vmatpush2.msra.mxu0 0.0
      %471 = vmatprep.subr.mxu0 0.0
      %472 = vmatpush2.msra.mxu0 0.0
      %473 = vmatprep.subr.mxu0 0.0
      %474 = vmatpush2.msra.mxu0 0.0
      %475 = vmatprep.subr.mxu0 0.0
      %476 = vmatpush2.msra.mxu0 0.0
      %477 = vmatprep.subr.mxu0 0.0
      %478 = vmatpush2.msra.mxu0 0.0
      %479 = vmatprep.subr.mxu0 0.0
      %480 = vmatpush2.msra.mxu0 0.0
      %481 = vmatprep.subr.mxu0 0.0
      %482 = vmatpush2.msra.mxu0 0.0
      %483 = vmatprep.subr.mxu0 0.0
      %484 = vmatpush2.msra.mxu0 0.0
      %485 = vmatprep.mubr.f32.mxu0 0.0
      %486 = vmatmul.mubr.f32.gmra.mxu0 %v416
      %v487 = vpop.f32.mrf.mxu0
      %v488 = vadd.f32 %v406, %v487
      %v489 = vpop.f32.mrf.mxu0
      %490 = vmatprep.mubr.f32.mxu0 0.0
      %491 = vmatmul.mubr.f32.gmra.mxu0 %v419
      %v492 = vpop.f32.mrf.mxu0
      %v493 = vadd.f32 %v411, %v492
      %v494 = vpop.f32.mrf.mxu0
      %495 = vdwg.mxu0
      %v496 = vld [vmem:[%s5] sm:$0x1]
      %v497 = vlaneseq
      %v498 = vshrl.u32 %v497, 7
      %v499 = vsub.s32 0, %v498
      %v500 = vrot.slane %v496, %v499
      %v501 = vadd.f32 %v488, %v500
      %v502 = vadd.f32 %v493, %v500
      %vm503 = vcmp.ge.f32.partialorder %v501, 0.0
      %vm504 = vcmp.ge.f32.partialorder %v502, 0.0
      %v505 = vmul.f32 %v501, 0.01
      %v506 = vmul.f32 %v502, 0.01
      %v507 = vsel %vm503, %v501, %v505
      %v508 = vsel %vm504, %v502, %v506
      %v509 = vld [vmem:[%s4 + $0x20] sm:$0xff]
      %v510 = vld [vmem:[%s4 + $0x28] sm:$0xff]
      %v511 = vld [vmem:[%s4 + $0x30] sm:$0xff]
      %v512 = vld [vmem:[%s4 + $0x38] sm:$0x1f]
      %vm513 = vcmask 105472
      %v515 = vsel %vm513, %v325, 0
      %v518 = vsel %vm513, %v326, 0
      %vm520 = vcmask 1044480
      %v522 = vsel %vm520, %v512, 0
      %524 = vmatprep.subr.mxu0 0.0
      %525 = vmatpush1.msra.mxu0 0.0
      %526 = vmatprep.subr.mxu0 0.0
      %527 = vmatpush1.msra.mxu0 0.0
      %528 = vmatprep.subr.mxu0 0.0
      %529 = vmatpush1.msra.mxu0 0.0
      %530 = vmatprep.subr.mxu0 0.0
      %531 = vmatpush1.msra.mxu0 0.0
      %532 = vmatprep.subr.mxu0 0.0
      %533 = vmatpush1.msra.mxu0 0.0
      %534 = vmatprep.subr.mxu0 0.0
      %535 = vmatpush1.msra.mxu0 0.0
      %536 = vmatprep.subr.mxu0 0.0
      %537 = vmatpush1.msra.mxu0 0.0
      %538 = vmatprep.subr.mxu0 0.0
      %539 = vmatpush1.msra.mxu0 0.0
      %540 = vmatprep.subr.mxu0 0.0
      %541 = vmatpush1.msra.mxu0 0.0
      %542 = vmatprep.subr.mxu0 0.0
      %543 = vmatpush1.msra.mxu0 0.0
      %544 = vmatprep.subr.mxu0 0.0
      %545 = vmatpush1.msra.mxu0 0.0
      %546 = vmatprep.subr.mxu0 0.0
      %547 = vmatpush1.msra.mxu0 0.0
      %548 = vmatprep.subr.mxu0 0.0
      %549 = vmatpush1.msra.mxu0 0.0
      %550 = vmatprep.subr.mxu0 0.0
      %551 = vmatpush1.msra.mxu0 0.0
      %552 = vmatprep.subr.mxu0 0.0
      %553 = vmatpush1.msra.mxu0 %v522
      %554 = vmatprep.subr.mxu0 0.0
      %555 = vmatpush1.msra.mxu0 %v511
      %556 = vmatprep.subr.mxu0 0.0
      %557 = vmatpush2.msra.mxu0 0.0
      %558 = vmatprep.subr.mxu0 0.0
      %559 = vmatpush2.msra.mxu0 0.0
      %560 = vmatprep.subr.mxu0 0.0
      %561 = vmatpush2.msra.mxu0 0.0
      %562 = vmatprep.subr.mxu0 0.0
      %563 = vmatpush2.msra.mxu0 0.0
      %564 = vmatprep.subr.mxu0 0.0
      %565 = vmatpush2.msra.mxu0 0.0
      %566 = vmatprep.subr.mxu0 0.0
      %567 = vmatpush2.msra.mxu0 0.0
      %568 = vmatprep.subr.mxu0 0.0
      %569 = vmatpush2.msra.mxu0 0.0
      %570 = vmatprep.subr.mxu0 0.0
      %571 = vmatpush2.msra.mxu0 0.0
      %572 = vmatprep.subr.mxu0 0.0
      %573 = vmatpush2.msra.mxu0 0.0
      %574 = vmatprep.subr.mxu0 0.0
      %575 = vmatpush2.msra.mxu0 0.0
      %576 = vmatprep.subr.mxu0 0.0
      %577 = vmatpush2.msra.mxu0 0.0
      %578 = vmatprep.subr.mxu0 0.0
      %579 = vmatpush2.msra.mxu0 0.0
      %580 = vmatprep.subr.mxu0 0.0
      %581 = vmatpush2.msra.mxu0 0.0
      %582 = vmatprep.subr.mxu0 0.0
      %583 = vmatpush2.msra.mxu0 0.0
      %584 = vmatprep.subr.mxu0 0.0
      %585 = vmatpush2.msra.mxu0 0.0
      %586 = vmatprep.subr.mxu0 0.0
      %587 = vmatpush2.msra.mxu0 0.0
      %588 = vmatprep.mubr.f32.mxu0 0.0
      %589 = vmatmul.mubr.f32.gmra.mxu0 %v515
      %v590 = vpop.f32.mrf.mxu0
      %v591 = vadd.f32 0.0, %v590
      %v592 = vpop.f32.mrf.mxu0
      %593 = vmatprep.mubr.f32.mxu0 0.0
      %594 = vmatmul.mubr.f32.gmra.mxu0 %v518
      %v595 = vpop.f32.mrf.mxu0
      %v596 = vadd.f32 0.0, %v595
      %v597 = vpop.f32.mrf.mxu0
      %598 = vdwg.mxu0
      %v600 = vsel %vm332, %v507, 0
      %v603 = vsel %vm332, %v508, 0
      %605 = vmatprep.subr.mxu0 0.0
      %606 = vmatpush1.msra.mxu0 0.0
      %607 = vmatprep.subr.mxu0 0.0
      %608 = vmatpush1.msra.mxu0 0.0
      %609 = vmatprep.subr.mxu0 0.0
      %610 = vmatpush1.msra.mxu0 0.0
      %611 = vmatprep.subr.mxu0 0.0
      %612 = vmatpush1.msra.mxu0 0.0
      %613 = vmatprep.subr.mxu0 0.0
      %614 = vmatpush1.msra.mxu0 0.0
      %615 = vmatprep.subr.mxu0 0.0
      %616 = vmatpush1.msra.mxu0 0.0
      %617 = vmatprep.subr.mxu0 0.0
      %618 = vmatpush1.msra.mxu0 0.0
      %619 = vmatprep.subr.mxu0 0.0
      %620 = vmatpush1.msra.mxu0 0.0
      %621 = vmatprep.subr.mxu0 0.0
      %622 = vmatpush1.msra.mxu0 0.0
      %623 = vmatprep.subr.mxu0 0.0
      %624 = vmatpush1.msra.mxu0 0.0
      %625 = vmatprep.subr.mxu0 0.0
      %626 = vmatpush1.msra.mxu0 0.0
      %627 = vmatprep.subr.mxu0 0.0
      %628 = vmatpush1.msra.mxu0 0.0
      %629 = vmatprep.subr.mxu0 0.0
      %630 = vmatpush1.msra.mxu0 0.0
      %631 = vmatprep.subr.mxu0 0.0
      %632 = vmatpush1.msra.mxu0 0.0
      %633 = vmatprep.subr.mxu0 0.0
      %634 = vmatpush1.msra.mxu0 %v510
      %635 = vmatprep.subr.mxu0 0.0
      %636 = vmatpush1.msra.mxu0 %v509
      %637 = vmatprep.subr.mxu0 0.0
      %638 = vmatpush2.msra.mxu0 0.0
      %639 = vmatprep.subr.mxu0 0.0
      %640 = vmatpush2.msra.mxu0 0.0
      %641 = vmatprep.subr.mxu0 0.0
      %642 = vmatpush2.msra.mxu0 0.0
      %643 = vmatprep.subr.mxu0 0.0
      %644 = vmatpush2.msra.mxu0 0.0
      %645 = vmatprep.subr.mxu0 0.0
      %646 = vmatpush2.msra.mxu0 0.0
      %647 = vmatprep.subr.mxu0 0.0
      %648 = vmatpush2.msra.mxu0 0.0
      %649 = vmatprep.subr.mxu0 0.0
      %650 = vmatpush2.msra.mxu0 0.0
      %651 = vmatprep.subr.mxu0 0.0
      %652 = vmatpush2.msra.mxu0 0.0
      %653 = vmatprep.subr.mxu0 0.0
      %654 = vmatpush2.msra.mxu0 0.0
      %655 = vmatprep.subr.mxu0 0.0
      %656 = vmatpush2.msra.mxu0 0.0
      %657 = vmatprep.subr.mxu0 0.0
      %658 = vmatpush2.msra.mxu0 0.0
      %659 = vmatprep.subr.mxu0 0.0
      %660 = vmatpush2.msra.mxu0 0.0
      %661 = vmatprep.subr.mxu0 0.0
      %662 = vmatpush2.msra.mxu0 0.0
      %663 = vmatprep.subr.mxu0 0.0
      %664 = vmatpush2.msra.mxu0 0.0
      %665 = vmatprep.subr.mxu0 0.0
      %666 = vmatpush2.msra.mxu0 0.0
      %667 = vmatprep.subr.mxu0 0.0
      %668 = vmatpush2.msra.mxu0 0.0
      %669 = vmatprep.mubr.f32.mxu0 0.0
      %670 = vmatmul.mubr.f32.gmra.mxu0 %v600
      %v671 = vpop.f32.mrf.mxu0
      %v672 = vadd.f32 %v591, %v671
      %v673 = vpop.f32.mrf.mxu0
      %674 = vmatprep.mubr.f32.mxu0 0.0
      %675 = vmatmul.mubr.f32.gmra.mxu0 %v603
      %v676 = vpop.f32.mrf.mxu0
      %v677 = vadd.f32 %v596, %v676
      %v678 = vpop.f32.mrf.mxu0
      %679 = vdwg.mxu0
      %v680 = vld [vmem:[%s5 + $0x5] sm:$0x1]
      %682 = vset.pattern.permute.xlu0 0
      %683 = vperm.xlu0 %682, %v327
      %v684 = vpop.permute.xlu0 %683
      %687 = vset.pattern.permute.xlu0 0
      %688 = vperm.xlu0 %687, %v328
      %v689 = vpop.permute.xlu0 %688
      %v691 = vlaneseq
      %v692 = vshrl.u32 %v691, 7
      %v693 = vsub.s32 0, %v692
      %v694 = vrot.slane %v680, %v693
      %v695 = vmul.f32 %v684, %v694
      %v696 = vmul.f32 %v689, %v694
      %v697 = vadd.f32 %v672, %v695
      %v698 = vadd.f32 %v677, %v696
      %v699 = vld [vmem:[%s5 + $0x1] sm:$0x1]
      %v700 = vlaneseq
      %v701 = vshrl.u32 %v700, 7
      %v702 = vsub.s32 0, %v701
      %v703 = vrot.slane %v699, %v702
      %v704 = vadd.f32 %v697, %v703
      %v705 = vadd.f32 %v698, %v703
      %vm706 = vcmp.ge.f32.partialorder %v704, 0.0
      %vm707 = vcmp.ge.f32.partialorder %v705, 0.0
      %v708 = vmul.f32 %v704, 0.01
      %v709 = vmul.f32 %v705, 0.01
      %v710 = vsel %vm706, %v704, %v708
      %v711 = vsel %vm707, %v705, %v709
      %v712 = vld [vmem:[%s4 + $0x40] sm:$0xff]
      %v713 = vld [vmem:[%s4 + $0x48] sm:$0xff]
      %v714 = vld [vmem:[%s4 + $0x50] sm:$0xff]
      %v715 = vld [vmem:[%s4 + $0x58] sm:$0xff]
      %v716 = vld [vmem:[%s4 + $0x60] sm:$0xff]
      %v717 = vld [vmem:[%s4 + $0x68] sm:$0xff]
      %v718 = vld [vmem:[%s4 + $0x70] sm:$0xff]
      %v719 = vld [vmem:[%s4 + $0x78] sm:$0xff]
      %v720 = vld [vmem:[%s4 + $0x80] sm:$0xff]
      %v721 = vld [vmem:[%s4 + $0x88] sm:$0xff]
      %v722 = vld [vmem:[%s4 + $0x90] sm:$0xff]
      %v723 = vld [vmem:[%s4 + $0x98] sm:$0xff]
      %v724 = vld [vmem:[%s4 + $0xa0] sm:$0xff]
      %v725 = vld [vmem:[%s4 + $0xa8] sm:$0xff]
      %v726 = vld [vmem:[%s4 + $0xb0] sm:$0xff]
      %v727 = vld [vmem:[%s4 + $0xb8] sm:$0xff]
      %v728 = vld [vmem:[%s5 + $0x2] sm:$0x1]
      %v729 = vlaneseq
      %v730 = vshrl.u32 %v729, 7
      %v731 = vsub.s32 0, %v730
      %v732 = vrot.slane %v728, %v731
      %733 = vmatprep.subr.mxu0 0.0
      %734 = vmatpush1.msra.mxu0 %v727
      %735 = vmatprep.subr.mxu0 0.0
      %736 = vmatpush1.msra.mxu0 %v726
      %737 = vmatprep.subr.mxu0 0.0
      %738 = vmatpush1.msra.mxu0 %v725
      %739 = vmatprep.subr.mxu0 0.0
      %740 = vmatpush1.msra.mxu0 %v724
      %741 = vmatprep.subr.mxu0 0.0
      %742 = vmatpush1.msra.mxu0 %v723
      %743 = vmatprep.subr.mxu0 0.0
      %744 = vmatpush1.msra.mxu0 %v722
      %745 = vmatprep.subr.mxu0 0.0
      %746 = vmatpush1.msra.mxu0 %v721
      %747 = vmatprep.subr.mxu0 0.0
      %748 = vmatpush1.msra.mxu0 %v720
      %749 = vmatprep.subr.mxu0 0.0
      %750 = vmatpush1.msra.mxu0 %v719
      %751 = vmatprep.subr.mxu0 0.0
      %752 = vmatpush1.msra.mxu0 %v718
      %753 = vmatprep.subr.mxu0 0.0
      %754 = vmatpush1.msra.mxu0 %v717
      %755 = vmatprep.subr.mxu0 0.0
      %756 = vmatpush1.msra.mxu0 %v716
      %757 = vmatprep.subr.mxu0 0.0
      %758 = vmatpush1.msra.mxu0 %v715
      %759 = vmatprep.subr.mxu0 0.0
      %760 = vmatpush1.msra.mxu0 %v714
      %761 = vmatprep.subr.mxu0 0.0
      %762 = vmatpush1.msra.mxu0 %v713
      %763 = vmatprep.subr.mxu0 0.0
      %764 = vmatpush1.msra.mxu0 %v712
      %765 = vmatprep.subr.mxu0 0.0
      %766 = vmatpush2.msra.mxu0 0.0
      %767 = vmatprep.subr.mxu0 0.0
      %768 = vmatpush2.msra.mxu0 0.0
      %769 = vmatprep.subr.mxu0 0.0
      %770 = vmatpush2.msra.mxu0 0.0
      %771 = vmatprep.subr.mxu0 0.0
      %772 = vmatpush2.msra.mxu0 0.0
      %773 = vmatprep.subr.mxu0 0.0
      %774 = vmatpush2.msra.mxu0 0.0
      %775 = vmatprep.subr.mxu0 0.0
      %776 = vmatpush2.msra.mxu0 0.0
      %777 = vmatprep.subr.mxu0 0.0
      %778 = vmatpush2.msra.mxu0 0.0
      %779 = vmatprep.subr.mxu0 0.0
      %780 = vmatpush2.msra.mxu0 0.0
      %781 = vmatprep.subr.mxu0 0.0
      %782 = vmatpush2.msra.mxu0 0.0
      %783 = vmatprep.subr.mxu0 0.0
      %784 = vmatpush2.msra.mxu0 0.0
      %785 = vmatprep.subr.mxu0 0.0
      %786 = vmatpush2.msra.mxu0 0.0
      %787 = vmatprep.subr.mxu0 0.0
      %788 = vmatpush2.msra.mxu0 0.0
      %789 = vmatprep.subr.mxu0 0.0
      %790 = vmatpush2.msra.mxu0 0.0
      %791 = vmatprep.subr.mxu0 0.0
      %792 = vmatpush2.msra.mxu0 0.0
      %793 = vmatprep.subr.mxu0 0.0
      %794 = vmatpush2.msra.mxu0 0.0
      %795 = vmatprep.subr.mxu0 0.0
      %796 = vmatpush2.msra.mxu0 0.0
      %797 = vmatprep.mubr.f32.mxu0 0.0
      %798 = vmatmul.mubr.f32.gmra.mxu0 %v710
      %v799 = vpop.f32.mrf.mxu0
      %v800 = vadd.f32 %v732, %v799
      %v801 = vpop.f32.mrf.mxu0
      %802 = vmatprep.mubr.f32.mxu0 0.0
      %803 = vmatmul.mubr.f32.gmra.mxu0 %v711
      %v804 = vpop.f32.mrf.mxu0
      %v805 = vadd.f32 %v732, %v804
      %v806 = vpop.f32.mrf.mxu0
      %807 = vdwg.mxu0
      %vm808 = vcmp.ge.f32.partialorder %v800, 0.0
      %vm809 = vcmp.ge.f32.partialorder %v805, 0.0
      %v810 = vmul.f32 %v800, 0.01
      %v811 = vmul.f32 %v805, 0.01
      %v812 = vsel %vm808, %v800, %v810
      %v813 = vsel %vm809, %v805, %v811
      %v814 = vld [vmem:[%s4 + $0xc0] sm:$0xff]
      %v815 = vld [vmem:[%s4 + $0xc8] sm:$0xff]
      %v816 = vld [vmem:[%s4 + $0xd0] sm:$0xff]
      %v817 = vld [vmem:[%s4 + $0xd8] sm:$0xff]
      %v818 = vld [vmem:[%s4 + $0xe0] sm:$0xff]
      %v819 = vld [vmem:[%s4 + $0xe8] sm:$0xff]
      %v820 = vld [vmem:[%s4 + $0xf0] sm:$0xff]
      %v821 = vld [vmem:[%s4 + $0xf8] sm:$0xff]
      %v822 = vld [vmem:[%s5 + $0x3] sm:$0x1]
      %v823 = vlaneseq
      %v824 = vshrl.u32 %v823, 7
      %v825 = vsub.s32 0, %v824
      %v826 = vrot.slane %v822, %v825
      %vm827 = vcmask 523264
      %v829 = vsel %vm827, %v812, 0
      %v832 = vsel %vm827, %v813, 0
      %834 = vmatprep.subr.mxu0 0.0
      %835 = vmatpush1.msra.mxu0 0.0
      %836 = vmatprep.subr.mxu0 0.0
      %837 = vmatpush1.msra.mxu0 0.0
      %838 = vmatprep.subr.mxu0 0.0
      %839 = vmatpush1.msra.mxu0 0.0
      %840 = vmatprep.subr.mxu0 0.0
      %841 = vmatpush1.msra.mxu0 0.0
      %842 = vmatprep.subr.mxu0 0.0
      %843 = vmatpush1.msra.mxu0 0.0
      %844 = vmatprep.subr.mxu0 0.0
      %845 = vmatpush1.msra.mxu0 0.0
      %846 = vmatprep.subr.mxu0 0.0
      %847 = vmatpush1.msra.mxu0 0.0
      %848 = vmatprep.subr.mxu0 0.0
      %849 = vmatpush1.msra.mxu0 0.0
      %850 = vmatprep.subr.mxu0 0.0
      %851 = vmatpush1.msra.mxu0 %v821
      %852 = vmatprep.subr.mxu0 0.0
      %853 = vmatpush1.msra.mxu0 %v820
      %854 = vmatprep.subr.mxu0 0.0
      %855 = vmatpush1.msra.mxu0 %v819
      %856 = vmatprep.subr.mxu0 0.0
      %857 = vmatpush1.msra.mxu0 %v818
      %858 = vmatprep.subr.mxu0 0.0
      %859 = vmatpush1.msra.mxu0 %v817
      %860 = vmatprep.subr.mxu0 0.0
      %861 = vmatpush1.msra.mxu0 %v816
      %862 = vmatprep.subr.mxu0 0.0
      %863 = vmatpush1.msra.mxu0 %v815
      %864 = vmatprep.subr.mxu0 0.0
      %865 = vmatpush1.msra.mxu0 %v814
      %866 = vmatprep.subr.mxu0 0.0
      %867 = vmatpush2.msra.mxu0 0.0
      %868 = vmatprep.subr.mxu0 0.0
      %869 = vmatpush2.msra.mxu0 0.0
      %870 = vmatprep.subr.mxu0 0.0
      %871 = vmatpush2.msra.mxu0 0.0
      %872 = vmatprep.subr.mxu0 0.0
      %873 = vmatpush2.msra.mxu0 0.0
      %874 = vmatprep.subr.mxu0 0.0
      %875 = vmatpush2.msra.mxu0 0.0
      %876 = vmatprep.subr.mxu0 0.0
      %877 = vmatpush2.msra.mxu0 0.0
      %878 = vmatprep.subr.mxu0 0.0
      %879 = vmatpush2.msra.mxu0 0.0
      %880 = vmatprep.subr.mxu0 0.0
      %881 = vmatpush2.msra.mxu0 0.0
      %882 = vmatprep.subr.mxu0 0.0
      %883 = vmatpush2.msra.mxu0 0.0
      %884 = vmatprep.subr.mxu0 0.0
      %885 = vmatpush2.msra.mxu0 0.0
      %886 = vmatprep.subr.mxu0 0.0
      %887 = vmatpush2.msra.mxu0 0.0
      %888 = vmatprep.subr.mxu0 0.0
      %889 = vmatpush2.msra.mxu0 0.0
      %890 = vmatprep.subr.mxu0 0.0
      %891 = vmatpush2.msra.mxu0 0.0
      %892 = vmatprep.subr.mxu0 0.0
      %893 = vmatpush2.msra.mxu0 0.0
      %894 = vmatprep.subr.mxu0 0.0
      %895 = vmatpush2.msra.mxu0 0.0
      %896 = vmatprep.subr.mxu0 0.0
      %897 = vmatpush2.msra.mxu0 0.0
      %898 = vmatprep.mubr.f32.mxu0 0.0
      %899 = vmatmul.mubr.f32.gmra.mxu0 %v829
      %v900 = vpop.f32.mrf.mxu0
      %v901 = vadd.f32 %v826, %v900
      %v902 = vpop.f32.mrf.mxu0
      %903 = vmatprep.mubr.f32.mxu0 0.0
      %904 = vmatmul.mubr.f32.gmra.mxu0 %v832
      %v905 = vpop.f32.mrf.mxu0
      %v906 = vadd.f32 %v826, %v905
      %v907 = vpop.f32.mrf.mxu0
      %908 = vdwg.mxu0
      %v909 = vmax.f32 %v901, 0.0
      %v910 = vmax.f32 %v906, 0.0
      %v911 = vld [vmem:[%s4 + $0x100] sm:$0xff]
      %v912 = vld [vmem:[%s4 + $0x108] sm:$0xff]
      %v913 = vld [vmem:[%s4 + $0x110] sm:$0xff]
      %v914 = vld [vmem:[%s4 + $0x118] sm:$0xff]
      %v915 = vld [vmem:[%s5 + $0x4] sm:$0x1]
      %v916 = vlaneseq
      %v917 = vshrl.u32 %v916, 7
      %v918 = vsub.s32 0, %v917
      %v919 = vrot.slane %v915, %v918
      %vm920 = vcmask 261120
      %v922 = vsel %vm920, %v909, 0
      %v925 = vsel %vm920, %v910, 0
      %927 = vmatprep.subr.mxu0 0.0
      %928 = vmatpush1.msra.mxu0 0.0
      %929 = vmatprep.subr.mxu0 0.0
      %930 = vmatpush1.msra.mxu0 0.0
      %931 = vmatprep.subr.mxu0 0.0
      %932 = vmatpush1.msra.mxu0 0.0
      %933 = vmatprep.subr.mxu0 0.0
      %934 = vmatpush1.msra.mxu0 0.0
      %935 = vmatprep.subr.mxu0 0.0
      %936 = vmatpush1.msra.mxu0 0.0
      %937 = vmatprep.subr.mxu0 0.0
      %938 = vmatpush1.msra.mxu0 0.0
      %939 = vmatprep.subr.mxu0 0.0
      %940 = vmatpush1.msra.mxu0 0.0
      %941 = vmatprep.subr.mxu0 0.0
      %942 = vmatpush1.msra.mxu0 0.0
      %943 = vmatprep.subr.mxu0 0.0
      %944 = vmatpush1.msra.mxu0 0.0
      %945 = vmatprep.subr.mxu0 0.0
      %946 = vmatpush1.msra.mxu0 0.0
      %947 = vmatprep.subr.mxu0 0.0
      %948 = vmatpush1.msra.mxu0 0.0
      %949 = vmatprep.subr.mxu0 0.0
      %950 = vmatpush1.msra.mxu0 0.0
      %951 = vmatprep.subr.mxu0 0.0
      %952 = vmatpush1.msra.mxu0 %v914
      %953 = vmatprep.subr.mxu0 0.0
      %954 = vmatpush1.msra.mxu0 %v913
      %955 = vmatprep.subr.mxu0 0.0
      %956 = vmatpush1.msra.mxu0 %v912
      %957 = vmatprep.subr.mxu0 0.0
      %958 = vmatpush1.msra.mxu0 %v911
      %959 = vmatprep.subr.mxu0 0.0
      %960 = vmatpush2.msra.mxu0 0.0
      %961 = vmatprep.subr.mxu0 0.0
      %962 = vmatpush2.msra.mxu0 0.0
      %963 = vmatprep.subr.mxu0 0.0
      %964 = vmatpush2.msra.mxu0 0.0
      %965 = vmatprep.subr.mxu0 0.0
      %966 = vmatpush2.msra.mxu0 0.0
      %967 = vmatprep.subr.mxu0 0.0
      %968 = vmatpush2.msra.mxu0 0.0
      %969 = vmatprep.subr.mxu0 0.0
      %970 = vmatpush2.msra.mxu0 0.0
      %971 = vmatprep.subr.mxu0 0.0
      %972 = vmatpush2.msra.mxu0 0.0
      %973 = vmatprep.subr.mxu0 0.0
      %974 = vmatpush2.msra.mxu0 0.0
      %975 = vmatprep.subr.mxu0 0.0
      %976 = vmatpush2.msra.mxu0 0.0
      %977 = vmatprep.subr.mxu0 0.0
      %978 = vmatpush2.msra.mxu0 0.0
      %979 = vmatprep.subr.mxu0 0.0
      %980 = vmatpush2.msra.mxu0 0.0
      %981 = vmatprep.subr.mxu0 0.0
      %982 = vmatpush2.msra.mxu0 0.0
      %983 = vmatprep.subr.mxu0 0.0
      %984 = vmatpush2.msra.mxu0 0.0
      %985 = vmatprep.subr.mxu0 0.0
      %986 = vmatpush2.msra.mxu0 0.0
      %987 = vmatprep.subr.mxu0 0.0
      %988 = vmatpush2.msra.mxu0 0.0
      %989 = vmatprep.subr.mxu0 0.0
      %990 = vmatpush2.msra.mxu0 0.0
      %991 = vmatprep.mubr.f32.mxu0 0.0
      %992 = vmatmul.mubr.f32.gmra.mxu0 %v922
      %v993 = vpop.f32.mrf.mxu0
      %v994 = vadd.f32 %v919, %v993
      %v995 = vpop.f32.mrf.mxu0
      %996 = vmatprep.mubr.f32.mxu0 0.0
      %997 = vmatmul.mubr.f32.gmra.mxu0 %v925
      %v998 = vpop.f32.mrf.mxu0
      %v999 = vadd.f32 %v919, %v998
      %v1000 = vpop.f32.mrf.mxu0
      %1001 = vdwg.mxu0
      %v1002 = vxor.u32 %v994, 2147483648
      %v1003 = vxor.u32 %v999, 2147483648
      %v1004 = vmul.f32 %v1002, 1.442695
      %v1005 = vpow.pop %v1004
      %v1006 = vmul.f32 %v1003, 1.442695
      %v1007 = vpow.pop %v1006
      %v1008 = vadd.f32 %v1005, 1.0
      %v1009 = vadd.f32 %v1007, 1.0
      %v1010 = vrcp.pop %v1008
      %v1011 = vmul.f32 1.0, %v1010
      %v1012 = vrcp.pop %v1009
      %v1013 = vmul.f32 1.0, %v1012
      %vm1014 = vcmask 15360
      %1015 = vst.msk [vmem:[%s319] sm:$0xff] %vm1014, %v1011
      %1016 = vst.msk [vmem:[%s319 + $0x8] sm:$0xff] %vm1014, %v1013
      %s1017 = smul.u32 2, %s17
      %p1018 = scmp.lt.s32.totalorder %s1017, 7
      %s1019 = scalar_select %p1018, %s1017, 7
      %s1020 = smul.addr %s1019, 8
      %s1021 = scalar_lea.vmem %s6, %s1020
      // Predicated region
      $region45: #{tpu_custom_call.1} parent=43 // pred_check
        %p1022 = pneg %p181
      $region46: #{tpu_custom_call.1} parent=43 // pred_check_branch
        %1024 = sbr.rel (%p1022) target = $region48
      $region47: #{tpu_custom_call.1} parent=43 // pred_region
        %s1025 = smul.u32 2, %s17
      $region48: #{tpu_custom_call.1} parent=43 // pred_fallthru
        _
    $region44: #{tpu_custom_call.1} parent=5 // pred_fallthru
      _
    %p1026 = scmp.le.s32.totalorder 2, %s12
    // Predicated region
    $region49: #{tpu_custom_call.1} parent=5 // pred_check
      %p1027 = pneg %p1026
    $region50: #{tpu_custom_call.1} parent=5 // pred_check_branch
      %1029 = sbr.rel (%p1027) target = $region52
    $region51: #{tpu_custom_call.1} parent=5 // pred_region
      %s1030 = ssub.s32 %s12, 2
      // Predicated region
      $region53: #{tpu_custom_call.1} parent=51 // pred_check
        %p1031 = pneg %p187
      $region54: #{tpu_custom_call.1} parent=51 // pred_check_branch
        %1033 = sbr.rel (%p1031) target = $region56
      $region55: #{tpu_custom_call.1} parent=51 // pred_region
        %s1034 = smul.u32 2, %s18
        %p1035 = scmp.lt.s32.totalorder %s1034, 7
        %s1036 = scalar_select %p1035, %s1034, 7
        %s1037 = smul.addr %s1036, 8
        %s1038 = scalar_lea.vmem %s6, %s1037
      $region56: #{tpu_custom_call.1} parent=51 // pred_fallthru
        _
    $region52: #{tpu_custom_call.1} parent=5 // pred_fallthru
      _
  $region6: #{tpu_custom_call.1} parent=0 // loop_footer
    %s16 = sadd.s32 1, %s12
  $region7: #{tpu_custom_call.1} parent=0 // loop_footer_branch
    %11 = sbr.rel target = $region3
  $region8: #{tpu_custom_call.1} parent=0 // loop_exit
    _

</llo_original>
